<compile_context>
chip_gen: v7x
topology: tpu7x:2x2x1
jax: 0.10.0
libtpu: 0.0.40
codegen_flags: <defaults>
</compile_context>

<pallas_src>
import functools

import jax
import jax.numpy as jnp
from jax.experimental import pallas as pl
from jax.experimental.pallas import tpu as pltpu

EPS = 1e-5
LANE = 128


def _round_up(n, m):
    return ((n + m - 1) // m) * m


def anet_kernel(x_ref, w1_ref, b1_ref, w2_ref, b2_ref, w3_ref, b3_ref, o_ref,
                *, matmul_dtype):
    # ---- fc1 + relu + bn1 (single-pass fused stats) ----
    x = x_ref[...].astype(matmul_dtype)          # no-op when matmul_dtype == f32
    h1 = jnp.dot(x, w1_ref[...], preferred_element_type=jnp.float32) + b1_ref[...]
    h1 = jnp.maximum(h1, 0.0)                    # f32 elementwise (VPU)
    m1 = jnp.mean(h1, axis=0, keepdims=True)
    # E[h^2] - m^2 is cancellation-prone if mean >> std; clamp guards it and
    # magnitudes here (0.1-scale init) keep it well-conditioned.
    v1 = jnp.maximum(jnp.mean(h1 * h1, axis=0, keepdims=True) - m1 * m1, 0.0)
    h1 = (h1 - m1) * jax.lax.rsqrt(v1 + EPS)     # rsqrt -> EUP slot (free)

    # ---- fc2 + relu + bn2 ----
    h2 = jnp.dot(h1.astype(matmul_dtype), w2_ref[...],
                 preferred_element_type=jnp.float32) + b2_ref[...]
    h2 = jnp.maximum(h2, 0.0)
    m2 = jnp.mean(h2, axis=0, keepdims=True)
    v2 = jnp.maximum(jnp.mean(h2 * h2, axis=0, keepdims=True) - m2 * m2, 0.0)
    h2 = (h2 - m2) * jax.lax.rsqrt(v2 + EPS)

    # ---- out + sigmoid (lane-padded head: full-width unmasked store) ----
    logits = jnp.dot(h2.astype(matmul_dtype), w3_ref[...],
                     preferred_element_type=jnp.float32) + b3_ref[...]
    o_ref[...] = jax.nn.sigmoid(logits).astype(o_ref.dtype)


def prepare_params(params, matmul_dtype=jnp.float32):
    """One-time glue (call once, outside the forward path).

    Transposes PyTorch (out, in) weights -> (in, out), zero-pads the fc1
    contraction dim and the output head to 128-lane multiples, casts weights
    to the MXU operand dtype, and reshapes biases to (1, out) f32.
    """
    w1 = params["w_fc1"].T.astype(matmul_dtype)            # (s_dim, 128)
    s_dim = w1.shape[0]
    k_pad = _round_up(max(s_dim, LANE), LANE)
    w1 = jnp.pad(w1, ((0, k_pad - s_dim), (0, 0)))         # (k_pad, 128)

    w3 = params["w_out"].T.astype(matmul_dtype)            # (256, a_dim)
    a_dim = w3.shape[1]
    a_pad = _round_up(max(a_dim, LANE), LANE)
    w3 = jnp.pad(w3, ((0, 0), (0, a_pad - a_dim)))         # (256, a_pad)
    b3 = jnp.pad(params["b_out"].astype(jnp.float32), (0, a_pad - a_dim))

    return {
        "w1": w1,
        "b1": params["b_fc1"].reshape(1, -1).astype(jnp.float32),
        "w2": params["w_fc2"].T.astype(matmul_dtype),
        "b2": params["b_fc2"].reshape(1, -1).astype(jnp.float32),
        "w3": w3,
        "b3": b3.reshape(1, -1),
    }


def anet_forward(x, prep, *, a_dim):
    """Single forward pass. x: (B, s_dim) float32. prep: prepare_params output."""
    B, s_dim = x.shape
    k_pad = prep["w1"].shape[0]
    a_pad = prep["w3"].shape[1]
    matmul_dtype = prep["w1"].dtype

    x_p = jnp.pad(x, ((0, 0), (0, k_pad - s_dim)))         # lane-align K once

    vmem = pl.BlockSpec(memory_space=pltpu.MemorySpace.VMEM)
    kernel = functools.partial(anet_kernel, matmul_dtype=matmul_dtype)
    out = pl.pallas_call(
        kernel,
        out_shape=jax.ShapeDtypeStruct((B, a_pad), jnp.float32),
        in_specs=[vmem] * 7,
        out_specs=vmem,
    )(x_p, prep["w1"], prep["b1"], prep["w2"], prep["b2"], prep["w3"], prep["b3"])
    return out[:, :a_dim]


def anet_forward_steps(xs, prep, *, a_dim):
    """T independent forward passes in one pallas_call (amortizes launch cost
    and keeps weights VMEM-resident across steps).

    xs: (T, B, s_dim) float32 -> (T, B, a_dim). Each step uses its own
    per-step-batch BN statistics, identical to calling anet_forward per step.
    """
    T, B, s_dim = xs.shape
    k_pad = prep["w1"].shape[0]
    a_pad = prep["w3"].shape[1]
    matmul_dtype = prep["w1"].dtype

    xs_p = jnp.pad(xs, ((0, 0), (0, 0), (0, k_pad - s_dim)))

    def resident(arr):
        # Constant index_map -> same block every grid step -> no re-DMA.
        return pl.BlockSpec(arr.shape, lambda t: (0, 0))

    kernel = functools.partial(anet_kernel, matmul_dtype=matmul_dtype)
    out = pl.pallas_call(
        kernel,
        out_shape=jax.ShapeDtypeStruct((T, B, a_pad), jnp.float32),
        grid=(T,),
        in_specs=[
            pl.BlockSpec((None, B, k_pad), lambda t: (t, 0, 0)),   # pipelined x
            resident(prep["w1"]),
            resident(prep["b1"]),
            resident(prep["w2"]),
            resident(prep["b2"]),
            resident(prep["w3"]),
            resident(prep["b3"]),
        ],
        out_specs=pl.BlockSpec((None, B, a_pad), lambda t: (t, 0, 0)),
        compiler_params=pltpu.CompilerParams(
            dimension_semantics=("parallel",)),    # steps independent -> 2 TCs on v7x
    )(xs_p, prep["w1"], prep["b1"], prep["w2"], prep["b2"], prep["w3"], prep["b3"])
    return out[:, :, :a_dim]


def init_params(key, s_dim, a_dim):
    k = jax.random.split(key, 6)
    # weight.data.normal_(0, 0.1) for fc1/fc2/out; biases: small deterministic init.
    return {
        "w_fc1": 0.1 * jax.random.normal(k[0], (128, s_dim), jnp.float32),
        "b_fc1": 0.01 * jax.random.normal(k[1], (128,), jnp.float32),
        "w_fc2": 0.1 * jax.random.normal(k[2], (256, 128), jnp.float32),
        "b_fc2": 0.01 * jax.random.normal(k[3], (256,), jnp.float32),
        "w_out": 0.1 * jax.random.normal(k[4], (a_dim, 256), jnp.float32),
        "b_out": 0.01 * jax.random.normal(k[5], (a_dim,), jnp.float32),
    }


def anet_ref(x, p):
    """Pure-JAX f32 reference mirroring the PyTorch forward (training-mode BN)."""
    h = jnp.maximum(x @ p["w_fc1"].T + p["b_fc1"], 0.0)
    h = (h - h.mean(0)) / jnp.sqrt(h.var(0) + EPS)
    h = jnp.maximum(h @ p["w_fc2"].T + p["b_fc2"], 0.0)
    h = (h - h.mean(0)) / jnp.sqrt(h.var(0) + EPS)
    return jax.nn.sigmoid(h @ p["w_out"].T + p["b_out"])


if __name__ == "__main__":
    B, S_DIM, A_DIM, T = 8, 32, 8, 4
    key = jax.random.PRNGKey(0)
    kx, ks, kp = jax.random.split(key, 3)
    x = jax.random.normal(kx, (B, S_DIM), jnp.float32)
    xs = jax.random.normal(ks, (T, B, S_DIM), jnp.float32)
    params = init_params(kp, S_DIM, A_DIM)

    ref = anet_ref(x, params)
    ref_steps = jax.vmap(lambda xi: anet_ref(xi, params))(xs)

    fwd = jax.jit(functools.partial(anet_forward, a_dim=A_DIM))
    fwd_steps = jax.jit(functools.partial(anet_forward_steps, a_dim=A_DIM))

    # 1) f32-operand path (default at tiny B): must match the reference tightly.
    prep_f32 = prepare_params(params)  # matmul_dtype defaults to float32
    out_f32 = jax.block_until_ready(fwd(x, prep_f32))
    assert out_f32.shape == (B, A_DIM)
    assert jnp.allclose(out_f32, ref, atol=1e-5, rtol=1e-5)

    # 2) Multi-step amortized path: T forward passes, one pallas_call,
    #    weights VMEM-resident across grid steps.
    out_steps = jax.block_until_ready(fwd_steps(xs, prep_f32))
    assert out_steps.shape == (T, B, A_DIM)
    assert jnp.allclose(out_steps, ref_steps, atol=1e-5, rtol=1e-5)

    # 3) bf16-operand path (large-batch perf mode): f32 MXU accumulation and
    #    f32 BN/sigmoid math keep the deviation small and bounded.
    prep_bf16 = prepare_params(params, matmul_dtype=jnp.bfloat16)
    out_bf16 = jax.block_until_ready(fwd(x, prep_bf16))
    assert out_bf16.shape == (B, A_DIM)
    assert jnp.allclose(out_bf16, ref, atol=5e-2, rtol=0.0)

    print("KERNEL_OK")
</pallas_src>

<mosaic_0001>
module attributes {stable_mosaic.version = 11 : i64} {
  func.func @anet_kernel(%arg0: memref<8x128xf32, #tpu.memory_space<vmem>>, %arg1: memref<128x128xf32, #tpu.memory_space<vmem>>, %arg2: memref<1x128xf32, #tpu.memory_space<vmem>>, %arg3: memref<128x256xf32, #tpu.memory_space<vmem>>, %arg4: memref<1x256xf32, #tpu.memory_space<vmem>>, %arg5: memref<256x128xf32, #tpu.memory_space<vmem>>, %arg6: memref<1x128xf32, #tpu.memory_space<vmem>>, %arg7: memref<8x128xf32, #tpu.memory_space<vmem>>) attributes {dimension_semantics = [], scalar_prefetch = 0 : i64, scratch_operands = 0 : i64, tpu.core_type = #tpu.core_type<tc>} {
    %c0 = arith.constant 0 : index
    %c0_0 = arith.constant 0 : index
    %0 = vector.load %arg0[%c0, %c0_0] : memref<8x128xf32, #tpu.memory_space<vmem>>, vector<8x128xf32>
    %c0_1 = arith.constant 0 : index
    %c0_2 = arith.constant 0 : index
    %1 = vector.load %arg1[%c0_1, %c0_2] : memref<128x128xf32, #tpu.memory_space<vmem>>, vector<128x128xf32>
    %cst = arith.constant dense<0.000000e+00> : vector<8x128xf32>
    %2 = tpu.matmul %0, %1, %cst {dimension_numbers = #tpu.dot_dimension_numbers<[1], [0], [0], [1], [0, 0, 1, 1], [], []>} : vector<8x128xf32>, vector<128x128xf32>, vector<8x128xf32> -> vector<8x128xf32>
    %c0_3 = arith.constant 0 : index
    %c0_4 = arith.constant 0 : index
    %3 = vector.load %arg2[%c0_3, %c0_4] : memref<1x128xf32, #tpu.memory_space<vmem>>, vector<1x128xf32>
    %4 = vector.broadcast %3 : vector<1x128xf32> to vector<8x128xf32>
    %5 = arith.addf %2, %4 : vector<8x128xf32>
    %cst_5 = arith.constant 0.000000e+00 : f32
    %6 = vector.broadcast %cst_5 : f32 to vector<8x128xf32>
    %7 = arith.maximumf %5, %6 : vector<8x128xf32>
    %cst_6 = arith.constant dense<0.000000e+00> : vector<128xf32>
    %8 = vector.multi_reduction <add>, %7, %cst_6 [0] : vector<8x128xf32> to vector<128xf32>
    %9 = vector.shape_cast %8 : vector<128xf32> to vector<1x128xf32>
    %cst_7 = arith.constant 8.000000e+00 : f32
    %10 = vector.broadcast %cst_7 : f32 to vector<1x128xf32>
    %11 = arith.divf %9, %10 : vector<1x128xf32>
    %12 = arith.mulf %7, %7 : vector<8x128xf32>
    %cst_8 = arith.constant dense<0.000000e+00> : vector<128xf32>
    %13 = vector.multi_reduction <add>, %12, %cst_8 [0] : vector<8x128xf32> to vector<128xf32>
    %14 = vector.shape_cast %13 : vector<128xf32> to vector<1x128xf32>
    %cst_9 = arith.constant 8.000000e+00 : f32
    %15 = vector.broadcast %cst_9 : f32 to vector<1x128xf32>
    %16 = arith.divf %14, %15 : vector<1x128xf32>
    %17 = arith.mulf %11, %11 : vector<1x128xf32>
    %18 = arith.subf %16, %17 : vector<1x128xf32>
    %cst_10 = arith.constant 0.000000e+00 : f32
    %19 = vector.broadcast %cst_10 : f32 to vector<1x128xf32>
    %20 = arith.maximumf %18, %19 : vector<1x128xf32>
    %21 = vector.broadcast %11 : vector<1x128xf32> to vector<8x128xf32>
    %22 = arith.subf %7, %21 : vector<8x128xf32>
    %cst_11 = arith.constant 9.99999974E-6 : f32
    %23 = vector.broadcast %cst_11 : f32 to vector<1x128xf32>
    %24 = arith.addf %20, %23 : vector<1x128xf32>
    %25 = math.rsqrt %24 : vector<1x128xf32>
    %26 = vector.broadcast %25 : vector<1x128xf32> to vector<8x128xf32>
    %27 = arith.mulf %22, %26 : vector<8x128xf32>
    %c0_12 = arith.constant 0 : index
    %c0_13 = arith.constant 0 : index
    %28 = vector.load %arg3[%c0_12, %c0_13] : memref<128x256xf32, #tpu.memory_space<vmem>>, vector<128x256xf32>
    %cst_14 = arith.constant dense<0.000000e+00> : vector<8x256xf32>
    %29 = tpu.matmul %27, %28, %cst_14 {dimension_numbers = #tpu.dot_dimension_numbers<[1], [0], [0], [1], [0, 0, 1, 1], [], []>} : vector<8x128xf32>, vector<128x256xf32>, vector<8x256xf32> -> vector<8x256xf32>
    %c0_15 = arith.constant 0 : index
    %c0_16 = arith.constant 0 : index
    %30 = vector.load %arg4[%c0_15, %c0_16] : memref<1x256xf32, #tpu.memory_space<vmem>>, vector<1x256xf32>
    %31 = vector.broadcast %30 : vector<1x256xf32> to vector<8x256xf32>
    %32 = arith.addf %29, %31 : vector<8x256xf32>
    %cst_17 = arith.constant 0.000000e+00 : f32
    %33 = vector.broadcast %cst_17 : f32 to vector<8x256xf32>
    %34 = arith.maximumf %32, %33 : vector<8x256xf32>
    %cst_18 = arith.constant dense<0.000000e+00> : vector<256xf32>
    %35 = vector.multi_reduction <add>, %34, %cst_18 [0] : vector<8x256xf32> to vector<256xf32>
    %36 = vector.shape_cast %35 : vector<256xf32> to vector<1x256xf32>
    %cst_19 = arith.constant 8.000000e+00 : f32
    %37 = vector.broadcast %cst_19 : f32 to vector<1x256xf32>
    %38 = arith.divf %36, %37 : vector<1x256xf32>
    %39 = arith.mulf %34, %34 : vector<8x256xf32>
    %cst_20 = arith.constant dense<0.000000e+00> : vector<256xf32>
    %40 = vector.multi_reduction <add>, %39, %cst_20 [0] : vector<8x256xf32> to vector<256xf32>
    %41 = vector.shape_cast %40 : vector<256xf32> to vector<1x256xf32>
    %cst_21 = arith.constant 8.000000e+00 : f32
    %42 = vector.broadcast %cst_21 : f32 to vector<1x256xf32>
    %43 = arith.divf %41, %42 : vector<1x256xf32>
    %44 = arith.mulf %38, %38 : vector<1x256xf32>
    %45 = arith.subf %43, %44 : vector<1x256xf32>
    %cst_22 = arith.constant 0.000000e+00 : f32
    %46 = vector.broadcast %cst_22 : f32 to vector<1x256xf32>
    %47 = arith.maximumf %45, %46 : vector<1x256xf32>
    %48 = vector.broadcast %38 : vector<1x256xf32> to vector<8x256xf32>
    %49 = arith.subf %34, %48 : vector<8x256xf32>
    %cst_23 = arith.constant 9.99999974E-6 : f32
    %50 = vector.broadcast %cst_23 : f32 to vector<1x256xf32>
    %51 = arith.addf %47, %50 : vector<1x256xf32>
    %52 = math.rsqrt %51 : vector<1x256xf32>
    %53 = vector.broadcast %52 : vector<1x256xf32> to vector<8x256xf32>
    %54 = arith.mulf %49, %53 : vector<8x256xf32>
    %c0_24 = arith.constant 0 : index
    %c0_25 = arith.constant 0 : index
    %55 = vector.load %arg5[%c0_24, %c0_25] : memref<256x128xf32, #tpu.memory_space<vmem>>, vector<256x128xf32>
    %cst_26 = arith.constant dense<0.000000e+00> : vector<8x128xf32>
    %56 = tpu.matmul %54, %55, %cst_26 {dimension_numbers = #tpu.dot_dimension_numbers<[1], [0], [0], [1], [0, 0, 1, 1], [], []>} : vector<8x256xf32>, vector<256x128xf32>, vector<8x128xf32> -> vector<8x128xf32>
    %c0_27 = arith.constant 0 : index
    %c0_28 = arith.constant 0 : index
    %57 = vector.load %arg6[%c0_27, %c0_28] : memref<1x128xf32, #tpu.memory_space<vmem>>, vector<1x128xf32>
    %58 = vector.broadcast %57 : vector<1x128xf32> to vector<8x128xf32>
    %59 = arith.addf %56, %58 : vector<8x128xf32>
    %60 = arith.negf %59 : vector<8x128xf32>
    %61 = math.exp %60 : vector<8x128xf32>
    %cst_29 = arith.constant 1.000000e+00 : f32
    %62 = vector.broadcast %cst_29 : f32 to vector<8x128xf32>
    %63 = arith.addf %62, %61 : vector<8x128xf32>
    %64 = arith.divf %62, %63 : vector<8x128xf32>
    %c0_30 = arith.constant 0 : index
    %c0_31 = arith.constant 0 : index
    %65 = vector.load %arg7[%c0_30, %c0_31] : memref<8x128xf32, #tpu.memory_space<vmem>>, vector<8x128xf32>
    tpu.vector_store %arg7[%c0_30, %c0_31], %64 {strides = array<i32>} : memref<8x128xf32, #tpu.memory_space<vmem>>, vector<8x128xf32>,
    return
  }
}

</mosaic_0001>

<llo_original>
// kernel: anet_forward.1
$region0: #{anet_forward.1}
  #allocation0 [shape = 'u32[]', space=smem, size = 0x4, offset = 0x4, fixed_abs, tag = 'smem constant byte address 0x4 - core index']
  #allocation1 [shape = 'u32[144,128]{1,0:T(1,128)}', space=vmem, size = 0x12000, scoped, tag = 'internal scratch']
  %s0 = inlined_call_operand.vmem [shape: f32[8,128], index: 0, kind: input, shape index: {}]
  %s1 = inlined_call_operand.hbm [shape: f32[128,128], index: 1, kind: input, shape index: {}]
  %s2 = inlined_call_operand.vmem [shape: f32[1,128], index: 2, kind: input, shape index: {}]
  %s3 = inlined_call_operand.hbm [shape: f32[128,256], index: 3, kind: input, shape index: {}]
  %s4 = inlined_call_operand.vmem [shape: f32[1,256], index: 4, kind: input, shape index: {}]
  %s5 = inlined_call_operand.hbm [shape: f32[256,128], index: 5, kind: input, shape index: {}]
  %s6 = inlined_call_operand.vmem [shape: f32[1,128], index: 6, kind: input, shape index: {}]
  %s7 = inlined_call_operand.hbm [shape: f32[8,128], index: 7, kind: output, shape index: {}]
  %s8 = sld [smem:[#allocation0]]
  $region50: #{anet_forward.1} parent=0
    _
  %s10 = ssub.s32 1, %s8
  %s11 = scalar_select 0, %s10, %s8
  $region1: #{anet_forward.1} parent=0
    #allocation2 [shape = 'u8[65536]{0}', space=vmem, size = 0x10000, scoped, tag = 'input window, operand 1, single buffered']
    #allocation3 [shape = 's32[1]{0}', space=sflag, size = 0x4, scoped, tag = 'scoped memory for anet_forward.1']
    #allocation4 [shape = 's32[1]{0}', space=sflag, size = 0x4, scoped, tag = 'scoped memory for anet_forward.1']
    #allocation5 [shape = 'u8[131072]{0}', space=vmem, size = 0x20000, scoped, tag = 'input window, operand 3, single buffered']
    #allocation6 [shape = 's32[1]{0}', space=sflag, size = 0x4, scoped, tag = 'scoped memory for anet_forward.1']
    #allocation7 [shape = 'u8[131072]{0}', space=vmem, size = 0x20000, scoped, tag = 'input window, operand 5, single buffered']
    #allocation8 [shape = 'u8[4096]{0}', space=vmem, size = 0x1000, scoped, tag = 'output window, operand 0, single buffered']
    %12 = vsyncpa [#allocation3], 0
    %13 = vsyncpa [#allocation6], 0
    %14 = vsyncpa [#allocation4], 0
    // Predicated region
    $region2: #{anet_forward.1} parent=1 // pred_check
      _
    $region3: #{anet_forward.1} parent=1 // pred_check_branch
      %16 = sbr.rel (0) target = $region5
    $region4: #{anet_forward.1} parent=1 // pred_region
      _
    $region5: #{anet_forward.1} parent=1 // pred_fallthru
      _
    // Predicated region
    $region6: #{anet_forward.1} parent=1 // pred_check
      _
    $region7: #{anet_forward.1} parent=1 // pred_check_branch
      %18 = sbr.rel (0) target = $region9
    $region8: #{anet_forward.1} parent=1 // pred_region
      %s20 = ssub.s32 2048, 2048
      %21 = vsyncadd [#allocation3], %s20
      %s22 = sshll.u32 [#allocation2], 4
      %s23 = int_to_ptr.vmem [resolvable:$true] %s22
      %28 = dma.hbm_to_vmem [thread:$0]  %s1, 2048, %s23, [#allocation3], 128, 128, 8
    $region9: #{anet_forward.1} parent=1 // pred_fallthru
      _
    // Predicated region
    $region10: #{anet_forward.1} parent=1 // pred_check
      _
    $region11: #{anet_forward.1} parent=1 // pred_check_branch
      %30 = sbr.rel (0) target = $region13
    $region12: #{anet_forward.1} parent=1 // pred_region
      _
    $region13: #{anet_forward.1} parent=1 // pred_fallthru
      _
    // Predicated region
    $region14: #{anet_forward.1} parent=1 // pred_check
      _
    $region15: #{anet_forward.1} parent=1 // pred_check_branch
      %32 = sbr.rel (0) target = $region17
    $region16: #{anet_forward.1} parent=1 // pred_region
      %s34 = ssub.s32 4096, 4096
      %35 = vsyncadd [#allocation6], %s34
      %s36 = sshll.u32 [#allocation5], 4
      %s37 = int_to_ptr.vmem [resolvable:$true] %s36
      %42 = dma.hbm_to_vmem [thread:$0]  %s3, 4096, %s37, [#allocation6], 256, 256, 16
    $region17: #{anet_forward.1} parent=1 // pred_fallthru
      _
    // Predicated region
    $region18: #{anet_forward.1} parent=1 // pred_check
      _
    $region19: #{anet_forward.1} parent=1 // pred_check_branch
      %44 = sbr.rel (0) target = $region21
    $region20: #{anet_forward.1} parent=1 // pred_region
      _
    $region21: #{anet_forward.1} parent=1 // pred_fallthru
      _
    // Predicated region
    $region22: #{anet_forward.1} parent=1 // pred_check
      _
    $region23: #{anet_forward.1} parent=1 // pred_check_branch
      %46 = sbr.rel (0) target = $region25
    $region24: #{anet_forward.1} parent=1 // pred_region
      %s48 = ssub.s32 4096, 4096
      %49 = vsyncadd [#allocation6], %s48
      %s50 = sshll.u32 [#allocation7], 4
      %s51 = int_to_ptr.vmem [resolvable:$true] %s50
      %56 = dma.hbm_to_vmem [thread:$0]  %s5, 4096, %s51, [#allocation6], 128, 128, 8
    $region25: #{anet_forward.1} parent=1 // pred_fallthru
      _
    // Predicated region
    $region26: #{anet_forward.1} parent=1 // pred_check
      _
    $region27: #{anet_forward.1} parent=1 // pred_check_branch
      %58 = sbr.rel (0) target = $region29
    $region28: #{anet_forward.1} parent=1 // pred_region
      _
    $region29: #{anet_forward.1} parent=1 // pred_fallthru
      _
    // Predicated region
    $region30: #{anet_forward.1} parent=1 // pred_check
      _
    $region31: #{anet_forward.1} parent=1 // pred_check_branch
      %60 = sbr.rel (0) target = $region33
    $region32: #{anet_forward.1} parent=1 // pred_region
      %61 = dma.done [#allocation3], 2048
    $region33: #{anet_forward.1} parent=1 // pred_fallthru
      _
    // Predicated region
    $region34: #{anet_forward.1} parent=1 // pred_check
      _
    $region35: #{anet_forward.1} parent=1 // pred_check_branch
      %63 = sbr.rel (0) target = $region37
    $region36: #{anet_forward.1} parent=1 // pred_region
      %64 = dma.done [#allocation6], 4096
    $region37: #{anet_forward.1} parent=1 // pred_fallthru
      _
    // Predicated region
    $region38: #{anet_forward.1} parent=1 // pred_check
      _
    $region39: #{anet_forward.1} parent=1 // pred_check_branch
      %66 = sbr.rel (0) target = $region41
    $region40: #{anet_forward.1} parent=1 // pred_region
      %67 = dma.done [#allocation6], 4096
    $region41: #{anet_forward.1} parent=1 // pred_fallthru
      _
    %v68 = vld [vmem:[%s0] sm:$0xff]
    %v69 = vld [vmem:[#allocation2] sm:$0xff]
    %v70 = vld [vmem:[#allocation2 + $0x8] sm:$0xff]
    %v71 = vld [vmem:[#allocation2 + $0x10] sm:$0xff]
    %v72 = vld [vmem:[#allocation2 + $0x18] sm:$0xff]
    %v73 = vld [vmem:[#allocation2 + $0x20] sm:$0xff]
    %v74 = vld [vmem:[#allocation2 + $0x28] sm:$0xff]
    %v75 = vld [vmem:[#allocation2 + $0x30] sm:$0xff]
    %v76 = vld [vmem:[#allocation2 + $0x38] sm:$0xff]
    %v77 = vld [vmem:[#allocation2 + $0x40] sm:$0xff]
    %v78 = vld [vmem:[#allocation2 + $0x48] sm:$0xff]
    %v79 = vld [vmem:[#allocation2 + $0x50] sm:$0xff]
    %v80 = vld [vmem:[#allocation2 + $0x58] sm:$0xff]
    %v81 = vld [vmem:[#allocation2 + $0x60] sm:$0xff]
    %v82 = vld [vmem:[#allocation2 + $0x68] sm:$0xff]
    %v83 = vld [vmem:[#allocation2 + $0x70] sm:$0xff]
    %v84 = vld [vmem:[#allocation2 + $0x78] sm:$0xff]
    %v85 = vld [vmem:[%s2] sm:$0x1]
    %v87 = vlaneseq
    %v88 = vshrl.u32 %v87, 7
    %v89 = vsub.s32 0, %v88
    %v90 = vrot.slane %v85, %v89
    %92 = vmatprep.subr.mxu0 0.0
    %93 = vmatpush1.msra.mxu0 %v69
    %94 = vmatprep.subr.mxu0 0.0
    %95 = vmatpush1.msra.mxu0 %v70
    %96 = vmatprep.subr.mxu0 0.0
    %97 = vmatpush1.msra.mxu0 %v71
    %98 = vmatprep.subr.mxu0 0.0
    %99 = vmatpush1.msra.mxu0 %v72
    %100 = vmatprep.subr.mxu0 0.0
    %101 = vmatpush1.msra.mxu0 %v73
    %102 = vmatprep.subr.mxu0 0.0
    %103 = vmatpush1.msra.mxu0 %v74
    %104 = vmatprep.subr.mxu0 0.0
    %105 = vmatpush1.msra.mxu0 %v75
    %106 = vmatprep.subr.mxu0 0.0
    %107 = vmatpush1.msra.mxu0 %v76
    %108 = vmatprep.subr.mxu0 0.0
    %109 = vmatpush1.msra.mxu0 %v77
    %110 = vmatprep.subr.mxu0 0.0
    %111 = vmatpush1.msra.mxu0 %v78
    %112 = vmatprep.subr.mxu0 0.0
    %113 = vmatpush1.msra.mxu0 %v79
    %114 = vmatprep.subr.mxu0 0.0
    %115 = vmatpush1.msra.mxu0 %v80
    %116 = vmatprep.subr.mxu0 0.0
    %117 = vmatpush1.msra.mxu0 %v81
    %118 = vmatprep.subr.mxu0 0.0
    %119 = vmatpush1.msra.mxu0 %v82
    %120 = vmatprep.subr.mxu0 0.0
    %121 = vmatpush1.msra.mxu0 %v83
    %122 = vmatprep.subr.mxu0 0.0
    %123 = vmatpush1.msra.mxu0 %v84
    %124 = vmatprep.subr.mxu0 0.0
    %125 = vmatpush1.msra.mxu0 0.0
    %126 = vmatprep.subr.mxu0 0.0
    %127 = vmatpush1.msra.mxu0 0.0
    %128 = vmatprep.subr.mxu0 0.0
    %129 = vmatpush1.msra.mxu0 0.0
    %130 = vmatprep.subr.mxu0 0.0
    %131 = vmatpush1.msra.mxu0 0.0
    %132 = vmatprep.subr.mxu0 0.0
    %133 = vmatpush1.msra.mxu0 0.0
    %134 = vmatprep.subr.mxu0 0.0
    %135 = vmatpush1.msra.mxu0 0.0
    %136 = vmatprep.subr.mxu0 0.0
    %137 = vmatpush1.msra.mxu0 0.0
    %138 = vmatprep.subr.mxu0 0.0
    %139 = vmatpush1.msra.mxu0 0.0
    %140 = vmatprep.subr.mxu0 0.0
    %141 = vmatpush1.msra.mxu0 0.0
    %142 = vmatprep.subr.mxu0 0.0
    %143 = vmatpush1.msra.mxu0 0.0
    %144 = vmatprep.subr.mxu0 0.0
    %145 = vmatpush1.msra.mxu0 0.0
    %146 = vmatprep.subr.mxu0 0.0
    %147 = vmatpush1.msra.mxu0 0.0
    %148 = vmatprep.subr.mxu0 0.0
    %149 = vmatpush1.msra.mxu0 0.0
    %150 = vmatprep.subr.mxu0 0.0
    %151 = vmatpush1.msra.mxu0 0.0
    %152 = vmatprep.subr.mxu0 0.0
    %153 = vmatpush1.msra.mxu0 0.0
    %154 = vmatprep.subr.mxu0 0.0
    %155 = vmatpush1.msra.mxu0 0.0
    %156 = vmatprep.mubr.f32.mxu0 0.0
    %157 = vmatmul.mubr.f32.gmra.mrb[0].mxu0 %v68
    %v158 = vpop.f32.mrb[0].mxu0
    %v159 = vadd.f32 %v90, %v158
    %v160 = vpop.f32.mrb[0].mxu0
    %161 = vdwg.mxu0
    %v162 = vmax.f32 %v159, 0.0
    %v163 = vrot.slane %v162, 4
    %v164 = vadd.f32 %v162, %v163
    %v165 = vrot.slane %v164, 2
    %v166 = vadd.f32 %v164, %v165
    %v167 = vrot.slane %v166, 1
    %v168 = vadd.f32 %v166, %v167
    %v169 = vrcp.pop 8.0
    %v170 = vmul.f32 %v168, %v169
    %v171 = vmul.f32 %v162, %v162
    %v172 = vrot.slane %v171, 4
    %v173 = vadd.f32 %v171, %v172
    %v174 = vrot.slane %v173, 2
    %v175 = vadd.f32 %v173, %v174
    %v176 = vrot.slane %v175, 1
    %v177 = vadd.f32 %v175, %v176
    %v178 = vmul.f32 %v177, %v169
    %v179 = vmul.f32 %v170, %v170
    %v180 = vsub.f32 %v178, %v179
    %v181 = vmax.f32 %v180, 0.0
    %v182 = vsub.f32 %v162, %v170
    %v183 = vadd.f32 %v181, 1e-05
    %v184 = vrsqrt.pop %v183
    %v185 = vmul.f32 %v182, %v184
    %v186 = vld [vmem:[#allocation5] sm:$0xff]
    %v187 = vld [vmem:[#allocation5 + $0x8] sm:$0xff]
    %v188 = vld [vmem:[#allocation5 + $0x10] sm:$0xff]
    %v189 = vld [vmem:[#allocation5 + $0x18] sm:$0xff]
    %v190 = vld [vmem:[#allocation5 + $0x20] sm:$0xff]
    %v191 = vld [vmem:[#allocation5 + $0x28] sm:$0xff]
    %v192 = vld [vmem:[#allocation5 + $0x30] sm:$0xff]
    %v193 = vld [vmem:[#allocation5 + $0x38] sm:$0xff]
    %v194 = vld [vmem:[#allocation5 + $0x40] sm:$0xff]
    %v195 = vld [vmem:[#allocation5 + $0x48] sm:$0xff]
    %v196 = vld [vmem:[#allocation5 + $0x50] sm:$0xff]
    %v197 = vld [vmem:[#allocation5 + $0x58] sm:$0xff]
    %v198 = vld [vmem:[#allocation5 + $0x60] sm:$0xff]
    %v199 = vld [vmem:[#allocation5 + $0x68] sm:$0xff]
    %v200 = vld [vmem:[#allocation5 + $0x70] sm:$0xff]
    %v201 = vld [vmem:[#allocation5 + $0x78] sm:$0xff]
    %v202 = vld [vmem:[#allocation5 + $0x80] sm:$0xff]
    %v203 = vld [vmem:[#allocation5 + $0x88] sm:$0xff]
    %v204 = vld [vmem:[#allocation5 + $0x90] sm:$0xff]
    %v205 = vld [vmem:[#allocation5 + $0x98] sm:$0xff]
    %v206 = vld [vmem:[#allocation5 + $0xa0] sm:$0xff]
    %v207 = vld [vmem:[#allocation5 + $0xa8] sm:$0xff]
    %v208 = vld [vmem:[#allocation5 + $0xb0] sm:$0xff]
    %v209 = vld [vmem:[#allocation5 + $0xb8] sm:$0xff]
    %v210 = vld [vmem:[#allocation5 + $0xc0] sm:$0xff]
    %v211 = vld [vmem:[#allocation5 + $0xc8] sm:$0xff]
    %v212 = vld [vmem:[#allocation5 + $0xd0] sm:$0xff]
    %v213 = vld [vmem:[#allocation5 + $0xd8] sm:$0xff]
    %v214 = vld [vmem:[#allocation5 + $0xe0] sm:$0xff]
    %v215 = vld [vmem:[#allocation5 + $0xe8] sm:$0xff]
    %v216 = vld [vmem:[#allocation5 + $0xf0] sm:$0xff]
    %v217 = vld [vmem:[#allocation5 + $0xf8] sm:$0xff]
    %v218 = vld [vmem:[%s4] sm:$0x3]
    %v220 = vlaneseq
    %v221 = vshrl.u32 %v220, 7
    %v222 = vsub.s32 0, %v221
    %v223 = vrot.slane %v218, %v222
    %v224 = vlaneseq
    %v225 = vshrl.u32 %v224, 7
    %v226 = vsub.s32 1, %v225
    %v227 = vrot.slane %v218, %v226
    %230 = vmatprep.subr.mxu0 %v187
    %231 = vmatpush1.msra.mxu0 %v186
    %232 = vmatprep.subr.mxu0 %v189
    %233 = vmatpush1.msra.mxu0 %v188
    %234 = vmatprep.subr.mxu0 %v191
    %235 = vmatpush1.msra.mxu0 %v190
    %236 = vmatprep.subr.mxu0 %v193
    %237 = vmatpush1.msra.mxu0 %v192
    %238 = vmatprep.subr.mxu0 %v195
    %239 = vmatpush1.msra.mxu0 %v194
    %240 = vmatprep.subr.mxu0 %v197
    %241 = vmatpush1.msra.mxu0 %v196
    %242 = vmatprep.subr.mxu0 %v199
    %243 = vmatpush1.msra.mxu0 %v198
    %244 = vmatprep.subr.mxu0 %v201
    %245 = vmatpush1.msra.mxu0 %v200
    %246 = vmatprep.subr.mxu0 %v203
    %247 = vmatpush1.msra.mxu0 %v202
    %248 = vmatprep.subr.mxu0 %v205
    %249 = vmatpush1.msra.mxu0 %v204
    %250 = vmatprep.subr.mxu0 %v207
    %251 = vmatpush1.msra.mxu0 %v206
    %252 = vmatprep.subr.mxu0 %v209
    %253 = vmatpush1.msra.mxu0 %v208
    %254 = vmatprep.subr.mxu0 %v211
    %255 = vmatpush1.msra.mxu0 %v210
    %256 = vmatprep.subr.mxu0 %v213
    %257 = vmatpush1.msra.mxu0 %v212
    %258 = vmatprep.subr.mxu0 %v215
    %259 = vmatpush1.msra.mxu0 %v214
    %260 = vmatprep.subr.mxu0 %v217
    %261 = vmatpush1.msra.mxu0 %v216
    %262 = vmatprep.subr.mxu0 0.0
    %263 = vmatpush1.msra.mxu0 0.0
    %264 = vmatprep.subr.mxu0 0.0
    %265 = vmatpush1.msra.mxu0 0.0
    %266 = vmatprep.subr.mxu0 0.0
    %267 = vmatpush1.msra.mxu0 0.0
    %268 = vmatprep.subr.mxu0 0.0
    %269 = vmatpush1.msra.mxu0 0.0
    %270 = vmatprep.subr.mxu0 0.0
    %271 = vmatpush1.msra.mxu0 0.0
    %272 = vmatprep.subr.mxu0 0.0
    %273 = vmatpush1.msra.mxu0 0.0
    %274 = vmatprep.subr.mxu0 0.0
    %275 = vmatpush1.msra.mxu0 0.0
    %276 = vmatprep.subr.mxu0 0.0
    %277 = vmatpush1.msra.mxu0 0.0
    %278 = vmatprep.subr.mxu0 0.0
    %279 = vmatpush1.msra.mxu0 0.0
    %280 = vmatprep.subr.mxu0 0.0
    %281 = vmatpush1.msra.mxu0 0.0
    %282 = vmatprep.subr.mxu0 0.0
    %283 = vmatpush1.msra.mxu0 0.0
    %284 = vmatprep.subr.mxu0 0.0
    %285 = vmatpush1.msra.mxu0 0.0
    %286 = vmatprep.subr.mxu0 0.0
    %287 = vmatpush1.msra.mxu0 0.0
    %288 = vmatprep.subr.mxu0 0.0
    %289 = vmatpush1.msra.mxu0 0.0
    %290 = vmatprep.subr.mxu0 0.0
    %291 = vmatpush1.msra.mxu0 0.0
    %292 = vmatprep.subr.mxu0 0.0
    %293 = vmatpush1.msra.mxu0 0.0
    %294 = vmatprep.mubr.f32.mxu0 0.0
    %295 = vmatmul.mubr.f32.gmra.mrb[0].mxu0 %v185
    %v296 = vpop.f32.mrb[0].mxu0
    %v297 = vadd.f32 %v223, %v296
    %v298 = vpop.f32.mrb[0].mxu0
    %v299 = vadd.f32 %v227, %v298
    %300 = vdwg.mxu0
    %v301 = vmax.f32 %v297, 0.0
    %v302 = vmax.f32 %v299, 0.0
    %v303 = vrot.slane %v301, 4
    %v304 = vadd.f32 %v301, %v303
    %v305 = vrot.slane %v304, 2
    %v306 = vadd.f32 %v304, %v305
    %v307 = vrot.slane %v306, 1
    %v308 = vadd.f32 %v306, %v307
    %v309 = vrot.slane %v302, 4
    %v310 = vadd.f32 %v302, %v309
    %v311 = vrot.slane %v310, 2
    %v312 = vadd.f32 %v310, %v311
    %v313 = vrot.slane %v312, 1
    %v314 = vadd.f32 %v312, %v313
    %v315 = vmul.f32 %v308, %v169
    %v316 = vmul.f32 %v314, %v169
    %v317 = vmul.f32 %v301, %v301
    %v318 = vmul.f32 %v302, %v302
    %v319 = vrot.slane %v317, 4
    %v320 = vadd.f32 %v317, %v319
    %v321 = vrot.slane %v320, 2
    %v322 = vadd.f32 %v320, %v321
    %v323 = vrot.slane %v322, 1
    %v324 = vadd.f32 %v322, %v323
    %v325 = vrot.slane %v318, 4
    %v326 = vadd.f32 %v318, %v325
    %v327 = vrot.slane %v326, 2
    %v328 = vadd.f32 %v326, %v327
    %v329 = vrot.slane %v328, 1
    %v330 = vadd.f32 %v328, %v329
    %v331 = vmul.f32 %v324, %v169
    %v332 = vmul.f32 %v330, %v169
    %v333 = vmul.f32 %v315, %v315
    %v334 = vmul.f32 %v316, %v316
    %v335 = vsub.f32 %v331, %v333
    %v336 = vsub.f32 %v332, %v334
    %v337 = vmax.f32 %v335, 0.0
    %v338 = vmax.f32 %v336, 0.0
    %v339 = vsub.f32 %v301, %v315
    %v340 = vsub.f32 %v302, %v316
    %v341 = vadd.f32 %v337, 1e-05
    %v342 = vadd.f32 %v338, 1e-05
    %v343 = vrsqrt.pop %v341
    %v344 = vrsqrt.pop %v342
    %v345 = vmul.f32 %v339, %v343
    %v346 = vmul.f32 %v340, %v344
    %v347 = vld [vmem:[#allocation7] sm:$0xff]
    %v348 = vld [vmem:[#allocation7 + $0x8] sm:$0xff]
    %v349 = vld [vmem:[#allocation7 + $0x10] sm:$0xff]
    %v350 = vld [vmem:[#allocation7 + $0x18] sm:$0xff]
    %v351 = vld [vmem:[#allocation7 + $0x20] sm:$0xff]
    %v352 = vld [vmem:[#allocation7 + $0x28] sm:$0xff]
    %v353 = vld [vmem:[#allocation7 + $0x30] sm:$0xff]
    %v354 = vld [vmem:[#allocation7 + $0x38] sm:$0xff]
    %v355 = vld [vmem:[#allocation7 + $0x40] sm:$0xff]
    %v356 = vld [vmem:[#allocation7 + $0x48] sm:$0xff]
    %v357 = vld [vmem:[#allocation7 + $0x50] sm:$0xff]
    %v358 = vld [vmem:[#allocation7 + $0x58] sm:$0xff]
    %v359 = vld [vmem:[#allocation7 + $0x60] sm:$0xff]
    %v360 = vld [vmem:[#allocation7 + $0x68] sm:$0xff]
    %v361 = vld [vmem:[#allocation7 + $0x70] sm:$0xff]
    %v362 = vld [vmem:[#allocation7 + $0x78] sm:$0xff]
    %v363 = vld [vmem:[#allocation7 + $0x80] sm:$0xff]
    %v364 = vld [vmem:[#allocation7 + $0x88] sm:$0xff]
    %v365 = vld [vmem:[#allocation7 + $0x90] sm:$0xff]
    %v366 = vld [vmem:[#allocation7 + $0x98] sm:$0xff]
    %v367 = vld [vmem:[#allocation7 + $0xa0] sm:$0xff]
    %v368 = vld [vmem:[#allocation7 + $0xa8] sm:$0xff]
    %v369 = vld [vmem:[#allocation7 + $0xb0] sm:$0xff]
    %v370 = vld [vmem:[#allocation7 + $0xb8] sm:$0xff]
    %v371 = vld [vmem:[#allocation7 + $0xc0] sm:$0xff]
    %v372 = vld [vmem:[#allocation7 + $0xc8] sm:$0xff]
    %v373 = vld [vmem:[#allocation7 + $0xd0] sm:$0xff]
    %v374 = vld [vmem:[#allocation7 + $0xd8] sm:$0xff]
    %v375 = vld [vmem:[#allocation7 + $0xe0] sm:$0xff]
    %v376 = vld [vmem:[#allocation7 + $0xe8] sm:$0xff]
    %v377 = vld [vmem:[#allocation7 + $0xf0] sm:$0xff]
    %v378 = vld [vmem:[#allocation7 + $0xf8] sm:$0xff]
    %v379 = vld [vmem:[%s6] sm:$0x1]
    %v381 = vlaneseq
    %v382 = vshrl.u32 %v381, 7
    %v383 = vsub.s32 0, %v382
    %v384 = vrot.slane %v379, %v383
    %386 = vmatprep.subr.mxu0 0.0
    %387 = vmatpush1.msra.mxu0 %v347
    %388 = vmatprep.subr.mxu0 0.0
    %389 = vmatpush1.msra.mxu0 %v348
    %390 = vmatprep.subr.mxu0 0.0
    %391 = vmatpush1.msra.mxu0 %v349
    %392 = vmatprep.subr.mxu0 0.0
    %393 = vmatpush1.msra.mxu0 %v350
    %394 = vmatprep.subr.mxu0 0.0
    %395 = vmatpush1.msra.mxu0 %v351
    %396 = vmatprep.subr.mxu0 0.0
    %397 = vmatpush1.msra.mxu0 %v352
    %398 = vmatprep.subr.mxu0 0.0
    %399 = vmatpush1.msra.mxu0 %v353
    %400 = vmatprep.subr.mxu0 0.0
    %401 = vmatpush1.msra.mxu0 %v354
    %402 = vmatprep.subr.mxu0 0.0
    %403 = vmatpush1.msra.mxu0 %v355
    %404 = vmatprep.subr.mxu0 0.0
    %405 = vmatpush1.msra.mxu0 %v356
    %406 = vmatprep.subr.mxu0 0.0
    %407 = vmatpush1.msra.mxu0 %v357
    %408 = vmatprep.subr.mxu0 0.0
    %409 = vmatpush1.msra.mxu0 %v358
    %410 = vmatprep.subr.mxu0 0.0
    %411 = vmatpush1.msra.mxu0 %v359
    %412 = vmatprep.subr.mxu0 0.0
    %413 = vmatpush1.msra.mxu0 %v360
    %414 = vmatprep.subr.mxu0 0.0
    %415 = vmatpush1.msra.mxu0 %v361
    %416 = vmatprep.subr.mxu0 0.0
    %417 = vmatpush1.msra.mxu0 %v362
    %418 = vmatprep.subr.mxu0 0.0
    %419 = vmatpush1.msra.mxu0 %v363
    %420 = vmatprep.subr.mxu0 0.0
    %421 = vmatpush1.msra.mxu0 %v364
    %422 = vmatprep.subr.mxu0 0.0
    %423 = vmatpush1.msra.mxu0 %v365
    %424 = vmatprep.subr.mxu0 0.0
    %425 = vmatpush1.msra.mxu0 %v366
    %426 = vmatprep.subr.mxu0 0.0
    %427 = vmatpush1.msra.mxu0 %v367
    %428 = vmatprep.subr.mxu0 0.0
    %429 = vmatpush1.msra.mxu0 %v368
    %430 = vmatprep.subr.mxu0 0.0
    %431 = vmatpush1.msra.mxu0 %v369
    %432 = vmatprep.subr.mxu0 0.0
    %433 = vmatpush1.msra.mxu0 %v370
    %434 = vmatprep.subr.mxu0 0.0
    %435 = vmatpush1.msra.mxu0 %v371
    %436 = vmatprep.subr.mxu0 0.0
    %437 = vmatpush1.msra.mxu0 %v372
    %438 = vmatprep.subr.mxu0 0.0
    %439 = vmatpush1.msra.mxu0 %v373
    %440 = vmatprep.subr.mxu0 0.0
    %441 = vmatpush1.msra.mxu0 %v374
    %442 = vmatprep.subr.mxu0 0.0
    %443 = vmatpush1.msra.mxu0 %v375
    %444 = vmatprep.subr.mxu0 0.0
    %445 = vmatpush1.msra.mxu0 %v376
    %446 = vmatprep.subr.mxu0 0.0
    %447 = vmatpush1.msra.mxu0 %v377
    %448 = vmatprep.subr.mxu0 0.0
    %449 = vmatpush1.msra.mxu0 %v378
    %450 = vmatprep.mubr.f32.mxu0 %v346
    %451 = vmatmul.mubr.f32.gmra.mrb[0].mxu0 %v345
    %v452 = vpop.f32.mrb[0].mxu0
    %v453 = vadd.f32 %v384, %v452
    %v454 = vpop.f32.mrb[0].mxu0
    %455 = vdwg.mxu0
    %v456 = vxor.u32 %v453, 2147483648
    %v457 = vmul.f32 %v456, 1.442695
    %v458 = vpow.pop %v457
    %v459 = vadd.f32 %v458, 1.0
    %v460 = vrcp.pop %v459
    %v461 = vmul.f32 1.0, %v460
    %462 = vst [vmem:[#allocation8] sm:$0xff] %v461
    // Predicated region
    $region42: #{anet_forward.1} parent=1 // pred_check
      _
    $region43: #{anet_forward.1} parent=1 // pred_check_branch
      %464 = sbr.rel (0) target = $region45
    $region44: #{anet_forward.1} parent=1 // pred_region
      %s466 = ssub.s32 128, 128
      %467 = vsyncadd [#allocation4], %s466
      %s469 = sshll.u32 [#allocation8], 4
      %s470 = int_to_ptr.vmem [resolvable:$true] %s469
      %472 = dma.vmem_to_hbm [thread:$0]  %s470, 128, %s7, [#allocation4]
    $region45: #{anet_forward.1} parent=1 // pred_fallthru
      _
    // Predicated region
    $region46: #{anet_forward.1} parent=1 // pred_check
      _
    $region47: #{anet_forward.1} parent=1 // pred_check_branch
      %474 = sbr.rel (0) target = $region49
    $region48: #{anet_forward.1} parent=1 // pred_region
      %475 = dma.done [#allocation4], 128
    $region49: #{anet_forward.1} parent=1 // pred_fallthru
      _
    %476 = vsyncpa [#allocation3], 1
    %477 = vsyncpa [#allocation6], 1
    %478 = vsyncpa [#allocation4], 1

</llo_original>
